<compile_context>
chip_gen: v7x
topology: tpu7x:2x2x1
jax: 0.10.0
libtpu: 0.0.40
codegen_flags: <defaults>
</compile_context>

<pallas_src>
import functools

import jax
import jax.numpy as jnp
from jax.experimental import pallas as pl
from jax.experimental.pallas import tpu as pltpu


def _sq_diff_sum_kernel(p_ref, t_ref, out_ref, acc_ref, *, n_rows, tile_rows):
    c = pl.program_id(0)          # core-split ("parallel") axis
    i = pl.program_id(1)          # reduction ("arbitrary") axis

    @pl.when(i == 0)
    def _():
        acc_ref[...] = jnp.zeros_like(acc_ref)

    # Global row ids for this block. Tail rows (and fully-overrun blocks from the
    # core split, whose DMA index is clamped in the index_map) are masked out.
    gb = c * pl.num_programs(1) + i
    rows = gb * tile_rows + jax.lax.broadcasted_iota(jnp.int32, p_ref.shape, 0)
    mask = rows < n_rows

    d = p_ref[...].astype(jnp.float32) - t_ref[...].astype(jnp.float32)
    sq = jnp.where(mask, d * d, jnp.float32(0.0))

    # Fold row-groups of 8 into the (8, D) accumulator: pure VPU vreg adds
    # (free filler under the DMA bottleneck). Splitting the major axis is a
    # layout no-op.
    acc_ref[...] += sq.reshape(tile_rows // 8, 8, -1).sum(axis=0)

    @pl.when(i == pl.num_programs(1) - 1)
    def _():
        s = jnp.sum(acc_ref[...])                       # single XLU reduce per core
        out_ref[...] = jnp.broadcast_to(s, out_ref.shape)  # lane-dense full-tile store


def _choose_tile_rows(n_rows, d, itemsize, target_block_bytes):
    # Sublane granularity: 8 for 4-byte, 16 for 2-byte, 32 for 1-byte dtypes.
    min_rows = 8 if itemsize >= 4 else (16 if itemsize == 2 else 32)
    rows = max(min_rows, target_block_bytes // max(1, d * itemsize))
    rows = (int(rows) // min_rows) * min_rows
    n_pad = int(pl.cdiv(n_rows, min_rows)) * min_rows   # don't over-allocate past N
    rows = min(rows, n_pad)
    return max(min_rows, rows)


def _sq_diff_total(predict: jax.Array, target: jax.Array,
                   target_block_bytes: int) -> jax.Array:
    N, D = predict.shape
    itemsize = jnp.dtype(predict.dtype).itemsize
    tile_rows = _choose_tile_rows(N, D, itemsize, target_block_bytes)

    total_blocks = int(pl.cdiv(N, tile_rows))
    n_split = 2 if total_blocks >= 2 else 1             # 2 TCs on v7x; harmless elsewhere
    bps = int(pl.cdiv(total_blocks, n_split))           # row-blocks per split
    grid = (n_split, bps)

    # Explicit VMEM budget: 2 inputs x 2 pipeline buffers x block + scratch + headroom.
    block_bytes = tile_rows * D * itemsize
    vmem_limit = int(min(max(2 * 2 * block_bytes + 8 * D * 4 + (4 << 20), 16 << 20),
                         48 << 20))

    def in_map(c, i):
        # Clamp so overrun steps (when total_blocks % n_split != 0) DMA a valid
        # block; their contribution is fully masked in the kernel.
        return (jnp.minimum(c * bps + i, total_blocks - 1), 0)

    kernel = functools.partial(_sq_diff_sum_kernel, n_rows=N, tile_rows=tile_rows)

    out = pl.pallas_call(
        kernel,
        out_shape=jax.ShapeDtypeStruct((n_split, 8, 128), jnp.float32),
        grid_spec=pltpu.PrefetchScalarGridSpec(
            num_scalar_prefetch=0,
            grid=grid,
            in_specs=[
                pl.BlockSpec((tile_rows, D), in_map),
                pl.BlockSpec((tile_rows, D), in_map),
            ],
            # Per-core partial result; same block across the reduction axis.
            out_specs=pl.BlockSpec((1, 8, 128), lambda c, i: (c, 0, 0)),
            scratch_shapes=[pltpu.VMEM((8, D), jnp.float32)],
        ),
        compiler_params=pltpu.CompilerParams(
            dimension_semantics=("parallel", "arbitrary"),
            vmem_limit_bytes=vmem_limit,
        ),
    )(predict, target)

    # Tiny cross-core combine (<= 2 floats) in the wrapper.
    return jnp.sum(out[:, 0, 0])


def l2_loss(predict: jax.Array, target: jax.Array, *, normalize: bool,
            target_block_bytes: int = 2 * 1024 * 1024) -> jax.Array:
    """Pallas-backed equivalent of L2Loss.forward for 2D (N, D) inputs."""
    assert predict.shape == target.shape and predict.ndim == 2
    N, D = predict.shape
    total = _sq_diff_total(predict, target, target_block_bytes)
    if normalize:
        return total / jnp.float32(N * D)          # .pow(2).mean()
    else:
        return total / jnp.float32(N) / 2.0        # .sum(1).mean(0) / 2


if __name__ == "__main__":
    key = jax.random.PRNGKey(0)

    # Small demo shapes. (20,128) exercises the masked tail block; the (40,128)
    # case uses a tiny block budget to exercise the multi-block grid and the
    # 2-way core split (with a clamped/fully-masked overrun step).
    cases = [
        (16, 128, 2 * 1024 * 1024),
        (20, 128, 2 * 1024 * 1024),
        (40, 128, 4096),
    ]
    for (N, D, blk_bytes) in cases:
        kp, kt = jax.random.split(jax.random.fold_in(key, N))
        predict = jax.random.normal(kp, (N, D), dtype=jnp.float32)
        target = jax.random.normal(kt, (N, D), dtype=jnp.float32)

        out_norm = jax.block_until_ready(
            l2_loss(predict, target, normalize=True, target_block_bytes=blk_bytes))
        out_raw = jax.block_until_ready(
            l2_loss(predict, target, normalize=False, target_block_bytes=blk_bytes))

        ref_norm = jnp.mean((predict - target) ** 2)
        ref_raw = jnp.mean(jnp.sum((predict - target) ** 2, axis=1), axis=0) / 2.0
        assert jnp.allclose(out_norm, ref_norm, rtol=1e-5, atol=1e-5), (out_norm, ref_norm)
        assert jnp.allclose(out_raw, ref_raw, rtol=1e-5, atol=1e-5), (out_raw, ref_raw)

    # bf16 inputs stream at half the bytes; accumulation stays f32 in-kernel.
    kp, kt = jax.random.split(jax.random.fold_in(key, 123))
    p_bf = jax.random.normal(kp, (16, 128), dtype=jnp.float32).astype(jnp.bfloat16)
    t_bf = jax.random.normal(kt, (16, 128), dtype=jnp.float32).astype(jnp.bfloat16)
    out_bf = jax.block_until_ready(l2_loss(p_bf, t_bf, normalize=True))
    ref_bf = jnp.mean((p_bf.astype(jnp.float32) - t_bf.astype(jnp.float32)) ** 2)
    assert jnp.allclose(out_bf, ref_bf, rtol=1e-5, atol=1e-5), (out_bf, ref_bf)

    print("KERNEL_OK")
</pallas_src>

<mosaic_0001>
module attributes {stable_mosaic.version = 11 : i64} {
  func.func @_sq_diff_sum_kernel(%arg0: i32, %arg1: i32, %arg2: memref<16x128xf32, #tpu.memory_space<vmem>>, %arg3: memref<16x128xf32, #tpu.memory_space<vmem>>, %arg4: memref<1x8x128xf32, #tpu.memory_space<vmem>>, %arg5: memref<8x128xf32, #tpu.memory_space<vmem>>) attributes {dimension_semantics = [#tpu.dimension_semantics<parallel>, #tpu.dimension_semantics<arbitrary>], iteration_bounds = array<i64: 1, 1>, scalar_prefetch = 0 : i64, scratch_operands = 1 : i64, tpu.core_type = #tpu.core_type<tc>, window_params = [{transform_indices = @transform_0, window_bounds = array<i64: 16, 128>}, {transform_indices = @transform_1, window_bounds = array<i64: 16, 128>}, {transform_indices = @transform_2, window_bounds = array<i64: 1, 8, 128>}]} {
    %c0_i32 = arith.constant 0 : i32
    %0 = arith.cmpi eq, %arg1, %c0_i32 : i32
    %1 = arith.extui %0 : i1 to i32
    %c0_i32_0 = arith.constant 0 : i32
    %2 = arith.cmpi ne, %1, %c0_i32_0 : i32
    scf.if %2 {
      %cst_12 = arith.constant 0.000000e+00 : f32
      %25 = vector.broadcast %cst_12 : f32 to vector<8x128xf32>
      %c0_13 = arith.constant 0 : index
      %c0_14 = arith.constant 0 : index
      %26 = vector.load %arg5[%c0_13, %c0_14] : memref<8x128xf32, #tpu.memory_space<vmem>>, vector<8x128xf32>
      tpu.vector_store %arg5[%c0_13, %c0_14], %25 {strides = array<i32>} : memref<8x128xf32, #tpu.memory_space<vmem>>, vector<8x128xf32>,
    } else {
    }
    %c1_i32 = arith.constant 1 : i32
    %3 = arith.muli %arg0, %c1_i32 : i32
    %4 = arith.addi %3, %arg1 : i32
    %c16_i32 = arith.constant 16 : i32
    %5 = arith.muli %4, %c16_i32 : i32
    %6 = tpu.iota {dimensions = array<i32: 0>} : vector<16x128xi32>
    %7 = vector.broadcast %5 : i32 to vector<16x128xi32>
    %8 = arith.addi %7, %6 : vector<16x128xi32>
    %c16_i32_1 = arith.constant 16 : i32
    %9 = vector.broadcast %c16_i32_1 : i32 to vector<16x128xi32>
    %10 = arith.cmpi slt, %8, %9 : vector<16x128xi32>
    %c0 = arith.constant 0 : index
    %c0_2 = arith.constant 0 : index
    %11 = vector.load %arg2[%c0, %c0_2] : memref<16x128xf32, #tpu.memory_space<vmem>>, vector<16x128xf32>
    %c0_3 = arith.constant 0 : index
    %c0_4 = arith.constant 0 : index
    %12 = vector.load %arg3[%c0_3, %c0_4] : memref<16x128xf32, #tpu.memory_space<vmem>>, vector<16x128xf32>
    %13 = arith.subf %11, %12 : vector<16x128xf32>
    %14 = arith.mulf %13, %13 : vector<16x128xf32>
    %cst = arith.constant 0.000000e+00 : f32
    %15 = vector.broadcast %cst : f32 to vector<16x128xf32>
    %16 = arith.select %10, %14, %15 : vector<16x128xi1>, vector<16x128xf32>
    %c0_5 = arith.constant 0 : index
    %c0_6 = arith.constant 0 : index
    %17 = vector.load %arg5[%c0_5, %c0_6] : memref<8x128xf32, #tpu.memory_space<vmem>>, vector<8x128xf32>
    %18 = vector.shape_cast %16 : vector<16x128xf32> to vector<2x8x128xf32>
    %cst_7 = arith.constant dense<0.000000e+00> : vector<8x128xf32>
    %19 = vector.multi_reduction <add>, %18, %cst_7 [0] : vector<2x8x128xf32> to vector<8x128xf32>
    %20 = arith.addf %17, %19 : vector<8x128xf32>
    %c0_8 = arith.constant 0 : index
    %c0_9 = arith.constant 0 : index
    %21 = vector.load %arg5[%c0_8, %c0_9] : memref<8x128xf32, #tpu.memory_space<vmem>>, vector<8x128xf32>
    tpu.vector_store %arg5[%c0_8, %c0_9], %20 {strides = array<i32>} : memref<8x128xf32, #tpu.memory_space<vmem>>, vector<8x128xf32>,
    %c0_i32_10 = arith.constant 0 : i32
    %22 = arith.cmpi eq, %arg1, %c0_i32_10 : i32
    %23 = arith.extui %22 : i1 to i32
    %c0_i32_11 = arith.constant 0 : i32
    %24 = arith.cmpi ne, %23, %c0_i32_11 : i32
    scf.if %24 {
      %c0_12 = arith.constant 0 : index
      %c0_13 = arith.constant 0 : index
      %25 = vector.load %arg5[%c0_12, %c0_13] : memref<8x128xf32, #tpu.memory_space<vmem>>, vector<8x128xf32>
      %26 = vector.shape_cast %25 : vector<8x128xf32> to vector<1x8x128xf32>
      %cst_14 = arith.constant dense<0.000000e+00> : vector<1xf32>
      %27 = vector.multi_reduction <add>, %26, %cst_14 [1, 2] : vector<1x8x128xf32> to vector<1xf32>
      %28 = vector.shape_cast %27 : vector<1xf32> to vector<1x1x1xf32>
      %29 = vector.extract %28[0, 0, 0] : f32 from vector<1x1x1xf32>
      %30 = vector.broadcast %29 : f32 to vector<1x8x128xf32>
      %c0_15 = arith.constant 0 : index
      %c0_16 = arith.constant 0 : index
      %c0_17 = arith.constant 0 : index
      %31 = vector.load %arg4[%c0_15, %c0_16, %c0_17] : memref<1x8x128xf32, #tpu.memory_space<vmem>>, vector<1x8x128xf32>
      tpu.vector_store %arg4[%c0_15, %c0_16, %c0_17], %30 {strides = array<i32>} : memref<1x8x128xf32, #tpu.memory_space<vmem>>, vector<1x8x128xf32>,
    } else {
    }
    return
  }
  func.func @transform_0(%arg0: i32, %arg1: i32) -> (i32, i32) {
    %c1_i32 = arith.constant 1 : i32
    %0 = arith.muli %arg0, %c1_i32 : i32
    %1 = arith.addi %0, %arg1 : i32
    %c0_i32 = arith.constant 0 : i32
    %2 = arith.minsi %1, %c0_i32 : i32
    %c0_i32_0 = arith.constant 0 : i32
    %c0_i32_1 = arith.constant 0 : i32
    return %2, %c0_i32_0 : i32, i32
  }
  func.func @transform_1(%arg0: i32, %arg1: i32) -> (i32, i32) {
    %c1_i32 = arith.constant 1 : i32
    %0 = arith.muli %arg0, %c1_i32 : i32
    %1 = arith.addi %0, %arg1 : i32
    %c0_i32 = arith.constant 0 : i32
    %2 = arith.minsi %1, %c0_i32 : i32
    %c0_i32_0 = arith.constant 0 : i32
    %c0_i32_1 = arith.constant 0 : i32
    return %2, %c0_i32_0 : i32, i32
  }
  func.func @transform_2(%arg0: i32, %arg1: i32) -> (i32, i32, i32) {
    %c0_i32 = arith.constant 0 : i32
    %c0_i32_0 = arith.constant 0 : i32
    %c0_i32_1 = arith.constant 0 : i32
    return %arg0, %c0_i32, %c0_i32_0 : i32, i32, i32
  }
}

</mosaic_0001>

<llo_original>
// kernel: tpu_custom_call.1
$region0: #{tpu_custom_call.1}
  #allocation0 [shape = 'u32[]', space=smem, size = 0x4, offset = 0x4, fixed_abs, tag = 'smem constant byte address 0x4 - core index']
  #allocation1 [shape = 'u32[144,128]{1,0:T(1,128)}', space=vmem, size = 0x12000, scoped, tag = 'internal scratch']
  #allocation2 [shape = 'f32[8,128]{1,0:T(8,128)}', space=vmem, size = 0x1000, scoped, tag = 'scratch operand']
  %s0 = inlined_call_operand.hbm [shape: f32[16,128], index: 0, kind: input, shape index: {}]
  %s1 = inlined_call_operand.hbm [shape: f32[16,128], index: 1, kind: input, shape index: {}]
  %s2 = inlined_call_operand.hbm [shape: f32[1,8,128], index: 2, kind: output, shape index: {}]
  %s3 = sld [smem:[#allocation0]]
  $region34: #{tpu_custom_call.1} parent=0
    _
  %s5 = ssub.s32 1, %s3
  %s6 = scalar_select 0, %s5, %s3
  $region1: #{tpu_custom_call.1} parent=0
    #allocation3 [shape = 'u8[8192]{0}', space=vmem, size = 0x2000, scoped, tag = 'input window, operand 0, single buffered']
    #allocation4 [shape = 's32[1]{0}', space=sflag, size = 0x4, scoped, tag = 'scoped memory for tpu_custom_call.1']
    #allocation5 [shape = 's32[1]{0}', space=sflag, size = 0x4, scoped, tag = 'scoped memory for tpu_custom_call.1']
    #allocation6 [shape = 'u8[8192]{0}', space=vmem, size = 0x2000, scoped, tag = 'input window, operand 1, single buffered']
    #allocation7 [shape = 's32[1]{0}', space=sflag, size = 0x4, scoped, tag = 'scoped memory for tpu_custom_call.1']
    #allocation8 [shape = 'u8[4096]{0}', space=vmem, size = 0x1000, scoped, tag = 'output window, operand 0, single buffered']
    %7 = vsyncpa [#allocation4], 0
    %8 = vsyncpa [#allocation7], 0
    %9 = vsyncpa [#allocation5], 0
    // Predicated region
    $region2: #{tpu_custom_call.1} parent=1 // pred_check
      _
    $region3: #{tpu_custom_call.1} parent=1 // pred_check_branch
      %11 = sbr.rel (0) target = $region5
    $region4: #{tpu_custom_call.1} parent=1 // pred_region
      %s12 = sadd.s32 0, 0
      %p13 = scmp.lt.s32.totalorder %s12, 0
      %s14 = scalar_select %p13, %s12, 0
      %s15 = smul.u32 2, %s14
      %s17 = ssub.s32 256, 256
      %18 = vsyncadd [#allocation4], %s17
      %s19 = smul.addr %s15, 128
      %s20 = scalar_lea.hbm %s0, %s19
      %s21 = sshll.u32 [#allocation3], 4
      %s22 = int_to_ptr.vmem [resolvable:$true] %s21
      %27 = dma.hbm_to_vmem [thread:$0]  %s20, 256, %s22, [#allocation4], 128, 128, 8
    $region5: #{tpu_custom_call.1} parent=1 // pred_fallthru
      _
    // Predicated region
    $region6: #{tpu_custom_call.1} parent=1 // pred_check
      _
    $region7: #{tpu_custom_call.1} parent=1 // pred_check_branch
      %29 = sbr.rel (0) target = $region9
    $region8: #{tpu_custom_call.1} parent=1 // pred_region
      %s30 = sadd.s32 0, 0
      %p31 = scmp.lt.s32.totalorder %s30, 0
      %s32 = scalar_select %p31, %s30, 0
      %s33 = smul.u32 2, %s32
      %s35 = ssub.s32 256, 256
      %36 = vsyncadd [#allocation7], %s35
      %s37 = smul.addr %s33, 128
      %s38 = scalar_lea.hbm %s1, %s37
      %s39 = sshll.u32 [#allocation6], 4
      %s40 = int_to_ptr.vmem [resolvable:$true] %s39
      %45 = dma.hbm_to_vmem [thread:$0]  %s38, 256, %s40, [#allocation7], 128, 128, 8
    $region9: #{tpu_custom_call.1} parent=1 // pred_fallthru
      _
    // Predicated region
    $region10: #{tpu_custom_call.1} parent=1 // pred_check
      _
    $region11: #{tpu_custom_call.1} parent=1 // pred_check_branch
      %47 = sbr.rel (0) target = $region13
    $region12: #{tpu_custom_call.1} parent=1 // pred_region
      %48 = dma.done [#allocation4], 256
    $region13: #{tpu_custom_call.1} parent=1 // pred_fallthru
      _
    // Predicated region
    $region14: #{tpu_custom_call.1} parent=1 // pred_check
      _
    $region15: #{tpu_custom_call.1} parent=1 // pred_check_branch
      %50 = sbr.rel (0) target = $region17
    $region16: #{tpu_custom_call.1} parent=1 // pred_region
      %51 = dma.done [#allocation7], 256
    $region17: #{tpu_custom_call.1} parent=1 // pred_fallthru
      _
    %s52 = sadd.s32 0, 0
    %p53 = scmp.lt.s32.totalorder %s52, 0
    %s54 = scalar_select %p53, %s52, 0
    %s55 = smul.u32 2, %s54
    %s56 = sadd.s32 0, 0
    %p57 = scmp.lt.s32.totalorder %s56, 0
    %s58 = scalar_select %p57, %s56, 0
    %s59 = smul.u32 2, %s58
    %p60 = scmp.eq.s32.totalorder 0, 0
    // Predicated region
    $region18: #{tpu_custom_call.1} parent=1 // pred_check
      %p61 = pneg %p60
    $region19: #{tpu_custom_call.1} parent=1 // pred_check_branch
      %63 = sbr.rel (%p61) target = $region21
    $region20: #{tpu_custom_call.1} parent=1 // pred_region
      %64 = vst [vmem:[#allocation2] sm:$0xff] 0.0
    $region21: #{tpu_custom_call.1} parent=1 // pred_fallthru
      _
    %s65 = sadd.s32 0, 0
    %s66 = smul.u32 %s65, 16
    %v67 = vlaneseq
    %v68 = vshrl.u32 %v67, 7
    %v69 = vadd.s32 %v68, 8
    %v70 = vstv %s66
    %v71 = vadd.s32 %v70, %v68
    %v72 = vadd.s32 %v70, %v69
    %vm73 = vcmp.lt.s32.totalorder %v71, 16
    %vm74 = vcmp.lt.s32.totalorder %v72, 16
    %v75 = vld [vmem:[#allocation3] sm:$0xff]
    %v76 = vld [vmem:[#allocation3 + $0x8] sm:$0xff]
    %v77 = vld [vmem:[#allocation6] sm:$0xff]
    %v78 = vld [vmem:[#allocation6 + $0x8] sm:$0xff]
    %v79 = vsub.f32 %v75, %v77
    %v80 = vsub.f32 %v76, %v78
    %v81 = vmul.f32 %v79, %v79
    %v82 = vmul.f32 %v80, %v80
    %v83 = vsel %vm73, %v81, 0.0
    %v84 = vsel %vm74, %v82, 0.0
    %v85 = vld [vmem:[#allocation2] sm:$0xff]
    %v86 = vadd.f32 %v83, %v84
    %v87 = vadd.f32 %v85, %v86
    %88 = vst [vmem:[#allocation2] sm:$0xff] %v87
    // Predicated region
    $region22: #{tpu_custom_call.1} parent=1 // pred_check
      %p89 = pneg %p60
    $region23: #{tpu_custom_call.1} parent=1 // pred_check_branch
      %91 = sbr.rel (%p89) target = $region25
    $region24: #{tpu_custom_call.1} parent=1 // pred_region
      %v92 = vld [vmem:[#allocation2] sm:$0xff]
      %93 = vadd.xlane.f32.xlu0 %v92
      %v94 = vpop.xlane.xlu0 %93
      %v95 = vrot.slane %v94, 4
      %v96 = vadd.f32 %v94, %v95
      %v97 = vrot.slane %v96, 2
      %v98 = vadd.f32 %v96, %v97
      %v99 = vrot.slane %v98, 1
      %v100 = vadd.f32 %v98, %v99
      %s101 = vtos %v100
      %v102 = vstv %s101
      %103 = vst [vmem:[#allocation8] sm:$0xff] %v102
    $region25: #{tpu_custom_call.1} parent=1 // pred_fallthru
      _
    // Predicated region
    $region26: #{tpu_custom_call.1} parent=1 // pred_check
      _
    $region27: #{tpu_custom_call.1} parent=1 // pred_check_branch
      %105 = sbr.rel (0) target = $region29
    $region28: #{tpu_custom_call.1} parent=1 // pred_region
      %s107 = ssub.s32 128, 128
      %108 = vsyncadd [#allocation5], %s107
      %s110 = sshll.u32 [#allocation8], 4
      %s111 = int_to_ptr.vmem [resolvable:$true] %s110
      %113 = dma.vmem_to_hbm [thread:$0]  %s111, 128, %s2, [#allocation5]
    $region29: #{tpu_custom_call.1} parent=1 // pred_fallthru
      _
    // Predicated region
    $region30: #{tpu_custom_call.1} parent=1 // pred_check
      _
    $region31: #{tpu_custom_call.1} parent=1 // pred_check_branch
      %115 = sbr.rel (0) target = $region33
    $region32: #{tpu_custom_call.1} parent=1 // pred_region
      %116 = dma.done [#allocation5], 128
    $region33: #{tpu_custom_call.1} parent=1 // pred_fallthru
      _
    %117 = vsyncpa [#allocation4], 1
    %118 = vsyncpa [#allocation7], 1
    %119 = vsyncpa [#allocation5], 1

</llo_original>
